<compile_context>
chip_gen: v5e
topology: v5e:2x2
jax: 0.10.0
libtpu: 0.0.40
codegen_flags: <defaults>
</compile_context>

<pallas_src>
import functools

import jax
import jax.numpy as jnp
from jax.experimental import pallas as pl
from jax.experimental.pallas import tpu as pltpu


_NEG_BIG = -1e30  # finite sanitization value for OOB rows (avoids -inf - (-inf) NaNs)


def _cdiv(a, b):
    return -(-a // b)


def _round_up(x, m):
    return (x + m - 1) // m * m


def _int_pow(x, n):
    """x**n for a static positive integer n via repeated squaring (VALU only)."""
    result = None
    base = x
    while n > 0:
        if n & 1:
            result = base if result is None else result * base
        n >>= 1
        if n:
            base = base * base
    return result


def _pow_static(base, gamma):
    """base**gamma for a static scalar gamma. Returns None when gamma == 0 (identity)."""
    g = float(gamma)
    if g == 0.0:
        return None
    if g.is_integer() and g > 0:
        return _int_pow(base, int(g))
    # Non-integer fallback: exp(g*log(base)); matches torch.pow(0, g>0) == 0.
    safe = jnp.maximum(base, jnp.float32(1e-30))
    return jnp.where(base > 0, jnp.exp(jnp.float32(g) * jnp.log(safe)), jnp.float32(0.0))


def _asl_kernel(logits_ref, target_ref, out_ref, acc_ref, *,
                gamma_pos, gamma_neg, eps, b_true, num_classes,
                block_b, tiles_per_part, needs_row_mask):
    c = pl.program_id(0)   # partial-sum index (parallel -> one per TensorCore on v7x)
    i = pl.program_id(1)   # batch-tile index within this partial (arbitrary/reduction)

    @pl.when(i == 0)
    def _():
        acc_ref[...] = jnp.zeros_like(acc_ref)

    x = logits_ref[...].astype(jnp.float32)            # (block_b, C)
    tgt = target_ref[...]                              # (block_b, 1) int32
    bb, cc = x.shape

    if needs_row_mask:
        # Sanitize out-of-range batch rows BEFORE the row max so garbage/phantom
        # rows cannot corrupt the per-row log-sum-exp (they are per-row anyway,
        # but garbage may contain NaN/inf bit patterns).
        row_ids = (c * tiles_per_part + i) * block_b + \
            jax.lax.broadcasted_iota(jnp.int32, (bb, 1), 0)
        row_valid = row_ids < b_true                   # (block_b, 1)
        x = jnp.where(row_valid, x, jnp.float32(_NEG_BIG))

    # log-softmax over the lane (class) axis -- one exp pass, reused for p.
    m = jnp.max(x, axis=-1, keepdims=True)             # (block_b, 1)
    z = x - m
    e = jnp.exp(z)                                     # single full-tile exp
    s = jnp.sum(e, axis=-1, keepdims=True)             # (block_b, 1)
    log_preds = z - jnp.log(s)                         # (block_b, C)
    p = e * (1.0 / s)                                  # softmax probs (reuses e)

    # one-hot target mask (no lane padding: the block's lane extent is exactly C).
    class_ids = jax.lax.broadcasted_iota(jnp.int32, (bb, cc), 1)
    targets_mask = class_ids == tgt                    # (block_b, C)

    # asymmetric focusing weight without jnp.power:
    #   base is (1 - p) at the target lane (exponent gamma_pos), p elsewhere (gamma_neg).
    w_pos = _pow_static(1.0 - p, gamma_pos)
    w_neg = _pow_static(p, gamma_neg)
    if w_pos is None and w_neg is None:
        weighted = log_preds
    else:
        wp = jnp.float32(1.0) if w_pos is None else w_pos
        wn = jnp.float32(1.0) if w_neg is None else w_neg
        weighted = log_preds * jnp.where(targets_mask, wp, wn)

    # label smoothing uses the true number of classes.
    t = targets_mask.astype(jnp.float32)
    t_sm = t * (1.0 - eps) + (eps / num_classes)

    row_loss = -jnp.sum(t_sm * weighted, axis=-1, keepdims=True)   # (block_b, 1)
    if needs_row_mask:
        row_loss = jnp.where(row_valid, row_loss, jnp.float32(0.0))
    acc_ref[...] += jnp.sum(row_loss, axis=0, keepdims=True)       # (1, 1)

    @pl.when(i == pl.num_programs(1) - 1)
    def _():
        # Lane-dense (8,128) output block; only [0, 0] of each partial is consumed.
        out_ref[...] = jnp.broadcast_to(acc_ref[...], out_ref.shape)


def asl_single_label(logits, target, *, gamma_pos=0.0, gamma_neg=4.0,
                     eps=0.1, reduction='mean', block_b=None, num_parts=2):
    """logits: (B, C) float (f32 or bf16); target: (B,) int. Returns scalar mean loss."""
    assert reduction == 'mean'
    B, C = logits.shape
    itemsize = jnp.dtype(logits.dtype).itemsize
    lanes = _round_up(C, 128)                  # VMEM lane footprint estimate
    bytes_per_row = lanes * itemsize

    # Generation-aware VMEM budget (v5e/v6e: 128 MiB physical, v7x: 64 MiB per TC).
    try:
        vmem_cap = int(pltpu.get_tpu_info().vmem_capacity_bytes)
    except Exception:
        vmem_cap = 64 << 20                    # conservative (v7x per-core)
    tile_budget = int(min(8 << 20, max(1 << 20, vmem_cap // 8)))

    # Large-C guard: even a minimal 8-row, double-buffered tile must fit VMEM.
    if 2 * 8 * bytes_per_row + (4 << 20) > vmem_cap:
        # TODO(synk): tile the class axis with an online (running max / running sum)
        # log-sum-exp over a second grid axis for very large C.
        raise ValueError(
            f"num_classes={C} too large for single-pass class axis on this TPU "
            f"(needs {2 * 8 * bytes_per_row} B of VMEM for double-buffered 8-row tiles, "
            f"capacity {vmem_cap} B).")

    if block_b is None:
        block_b = max(8, (tile_budget // bytes_per_row) // 8 * 8)
    block_b = int(_round_up(max(8, min(int(block_b), _round_up(B, 8))), 8))

    n_tiles = _cdiv(B, block_b)
    num_parts = int(max(1, min(num_parts, n_tiles)))
    tiles_per_part = _cdiv(n_tiles, num_parts)
    # Row masking only needed when the (parts x tiles x block_b) coverage over-shoots B.
    needs_row_mask = (num_parts * tiles_per_part * block_b) != B

    target2d = target.astype(jnp.int32).reshape(B, 1)

    tile_bytes = block_b * bytes_per_row
    vmem_limit = int(min(vmem_cap, max(32 << 20, 2 * tile_bytes + (8 << 20))))

    kernel = functools.partial(
        _asl_kernel, gamma_pos=float(gamma_pos), gamma_neg=float(gamma_neg),
        eps=float(eps), b_true=B, num_classes=C, block_b=block_b,
        tiles_per_part=tiles_per_part, needs_row_mask=needs_row_mask)

    last_tile = n_tiles - 1

    def in_map(c, i):
        # Clamp the phantom tile of an uneven split to the last valid tile;
        # its rows are masked out in-kernel via the row-validity test.
        return (jnp.minimum(c * tiles_per_part + i, last_tile), 0)

    out = pl.pallas_call(
        kernel,
        out_shape=jax.ShapeDtypeStruct((num_parts * 8, 128), jnp.float32),
        grid_spec=pltpu.PrefetchScalarGridSpec(
            num_scalar_prefetch=0,
            grid=(num_parts, tiles_per_part),
            in_specs=[
                pl.BlockSpec((block_b, C), in_map),
                pl.BlockSpec((block_b, 1), in_map),
            ],
            out_specs=pl.BlockSpec((8, 128), lambda c, i: (c, 0)),
            scratch_shapes=[pltpu.VMEM((1, 1), jnp.float32)],
        ),
        compiler_params=pltpu.CompilerParams(
            dimension_semantics=("parallel", "arbitrary"),
            vmem_limit_bytes=vmem_limit),
    )(logits, target2d)

    partials = out[0::8, 0]                    # one partial sum per "part"
    return jnp.sum(partials) / B               # mean over the true batch


def _reference_asl(logits, target, gamma_pos=0.0, gamma_neg=4.0, eps=0.1):
    # pure-JAX reference mirroring the PyTorch forward
    C = logits.shape[-1]
    x = logits.astype(jnp.float32)
    log_preds = jax.nn.log_softmax(x, axis=-1)
    targets = jax.nn.one_hot(target, C, dtype=jnp.float32)
    anti = 1.0 - targets
    xs_pos = jnp.exp(log_preds) * targets
    xs_neg = (1.0 - jnp.exp(log_preds)) * anti
    w = jnp.power(1.0 - xs_pos - xs_neg, gamma_pos * targets + gamma_neg * anti)
    lw = log_preds * w
    t_sm = targets * (1.0 - eps) + eps / C
    return (-(t_sm * lw).sum(axis=-1)).mean()


if __name__ == "__main__":
    key = jax.random.PRNGKey(0)
    k1, k2, k3, k4, k5, k6 = jax.random.split(key, 6)

    # Case 1: small shape consistent with the module's (batch, num_classes) contract.
    B, C = 8, 16
    logits = jax.random.normal(k1, (B, C), dtype=jnp.float32)
    target = jax.random.randint(k2, (B,), 0, C, dtype=jnp.int32)
    loss = asl_single_label(logits, target)
    jax.block_until_ready(loss)
    ref = _reference_asl(logits, target)
    assert jnp.allclose(loss, ref, rtol=1e-4, atol=1e-6), (loss, ref)

    # Case 2: unaligned B and C with a small explicit block -> multi-tile grid,
    # two-partial split with a clamped phantom tile and in-kernel row masking.
    B2, C2 = 20, 200
    logits2 = jax.random.normal(k3, (B2, C2), dtype=jnp.float32)
    target2 = jax.random.randint(k4, (B2,), 0, C2, dtype=jnp.int32)
    loss2 = asl_single_label(logits2, target2, block_b=8)
    jax.block_until_ready(loss2)
    ref2 = _reference_asl(logits2, target2)
    assert jnp.allclose(loss2, ref2, rtol=1e-4, atol=1e-6), (loss2, ref2)

    # Case 3: bf16 logits -- no wrapper cast, per-tile upcast inside the kernel.
    B3, C3 = 32, 300
    logits3 = jax.random.normal(k5, (B3, C3), dtype=jnp.bfloat16)
    target3 = jax.random.randint(k6, (B3,), 0, C3, dtype=jnp.int32)
    loss3 = asl_single_label(logits3, target3)
    jax.block_until_ready(loss3)
    ref3 = _reference_asl(logits3, target3)
    assert jnp.allclose(loss3, ref3, rtol=1e-3, atol=1e-5), (loss3, ref3)

    print("KERNEL_OK")
</pallas_src>

<mosaic_0001>
module attributes {stable_mosaic.version = 11 : i64} {
  func.func @_asl_kernel(%arg0: i32, %arg1: i32, %arg2: memref<8x16xf32, #tpu.memory_space<vmem>>, %arg3: memref<8x1xi32, #tpu.memory_space<vmem>>, %arg4: memref<8x128xf32, #tpu.memory_space<vmem>>, %arg5: memref<1x1xf32, #tpu.memory_space<vmem>>) attributes {dimension_semantics = [#tpu.dimension_semantics<parallel>, #tpu.dimension_semantics<arbitrary>], iteration_bounds = array<i64: 1, 1>, scalar_prefetch = 0 : i64, scratch_operands = 1 : i64, tpu.core_type = #tpu.core_type<tc>, window_params = [{transform_indices = @transform_0, window_bounds = array<i64: 8, 16>}, {transform_indices = @transform_1, window_bounds = array<i64: 8, 1>}, {transform_indices = @transform_2, window_bounds = array<i64: 8, 128>}]} {
    %c0_i32 = arith.constant 0 : i32
    %0 = arith.cmpi eq, %arg1, %c0_i32 : i32
    %1 = arith.extui %0 : i1 to i32
    %c0_i32_0 = arith.constant 0 : i32
    %2 = arith.cmpi ne, %1, %c0_i32_0 : i32
    scf.if %2 {
      %cst_18 = arith.constant 0.000000e+00 : f32
      %46 = vector.broadcast %cst_18 : f32 to vector<1x1xf32>
      %c0_19 = arith.constant 0 : index
      %c0_20 = arith.constant 0 : index
      %47 = vector.load %arg5[%c0_19, %c0_20] : memref<1x1xf32, #tpu.memory_space<vmem>>, vector<1x1xf32>
      tpu.vector_store %arg5[%c0_19, %c0_20], %46 {strides = array<i32>} : memref<1x1xf32, #tpu.memory_space<vmem>>, vector<1x1xf32>,
    } else {
    }
    %c0 = arith.constant 0 : index
    %c0_1 = arith.constant 0 : index
    %3 = vector.load %arg2[%c0, %c0_1] : memref<8x16xf32, #tpu.memory_space<vmem>>, vector<8x16xf32>
    %c0_2 = arith.constant 0 : index
    %c0_3 = arith.constant 0 : index
    %4 = vector.load %arg3[%c0_2, %c0_3] : memref<8x1xi32, #tpu.memory_space<vmem>>, vector<8x1xi32>
    %cst = arith.constant dense<0xFF800000> : vector<8xf32>
    %5 = vector.multi_reduction <maximumf>, %3, %cst [1] : vector<8x16xf32> to vector<8xf32>
    %6 = vector.shape_cast %5 : vector<8xf32> to vector<8x1xf32>
    %7 = vector.broadcast %6 : vector<8x1xf32> to vector<8x16xf32>
    %8 = arith.subf %3, %7 : vector<8x16xf32>
    %9 = math.exp %8 : vector<8x16xf32>
    %cst_4 = arith.constant dense<0.000000e+00> : vector<8xf32>
    %10 = vector.multi_reduction <add>, %9, %cst_4 [1] : vector<8x16xf32> to vector<8xf32>
    %11 = vector.shape_cast %10 : vector<8xf32> to vector<8x1xf32>
    %12 = math.log %11 : vector<8x1xf32>
    %13 = vector.broadcast %12 : vector<8x1xf32> to vector<8x16xf32>
    %14 = arith.subf %8, %13 : vector<8x16xf32>
    %cst_5 = arith.constant 1.000000e+00 : f32
    %15 = vector.broadcast %cst_5 : f32 to vector<8x1xf32>
    %16 = arith.divf %15, %11 : vector<8x1xf32>
    %17 = vector.broadcast %16 : vector<8x1xf32> to vector<8x16xf32>
    %18 = arith.mulf %9, %17 : vector<8x16xf32>
    %19 = tpu.iota {dimensions = array<i32: 1>} : vector<8x16xi32>
    %20 = vector.broadcast %4 : vector<8x1xi32> to vector<8x16xi32>
    %21 = arith.cmpi eq, %19, %20 : vector<8x16xi32>
    %22 = arith.mulf %18, %18 : vector<8x16xf32>
    %23 = arith.mulf %22, %22 : vector<8x16xf32>
    %cst_6 = arith.constant 1.000000e+00 : f32
    %24 = vector.broadcast %cst_6 : f32 to vector<8x16xf32>
    %25 = arith.select %21, %24, %23 : vector<8x16xi1>, vector<8x16xf32>
    %26 = arith.mulf %14, %25 : vector<8x16xf32>
    %27 = arith.extui %21 : vector<8x16xi1> to vector<8x16xi32>
    %28 = arith.sitofp %27 : vector<8x16xi32> to vector<8x16xf32>
    %cst_7 = arith.constant 0.899999976 : f32
    %29 = vector.broadcast %cst_7 : f32 to vector<8x16xf32>
    %30 = arith.mulf %28, %29 : vector<8x16xf32>
    %cst_8 = arith.constant 6.250000e-03 : f32
    %31 = vector.broadcast %cst_8 : f32 to vector<8x16xf32>
    %32 = arith.addf %30, %31 : vector<8x16xf32>
    %33 = arith.mulf %32, %26 : vector<8x16xf32>
    %cst_9 = arith.constant dense<0.000000e+00> : vector<8xf32>
    %34 = vector.multi_reduction <add>, %33, %cst_9 [1] : vector<8x16xf32> to vector<8xf32>
    %35 = vector.shape_cast %34 : vector<8xf32> to vector<8x1xf32>
    %cst_10 = arith.constant 0.000000e+00 : f32
    %36 = vector.broadcast %cst_10 : f32 to vector<8x1xf32>
    %37 = arith.subf %36, %35 : vector<8x1xf32>
    %c0_11 = arith.constant 0 : index
    %c0_12 = arith.constant 0 : index
    %38 = vector.load %arg5[%c0_11, %c0_12] : memref<1x1xf32, #tpu.memory_space<vmem>>, vector<1x1xf32>
    %cst_13 = arith.constant dense<0.000000e+00> : vector<1xf32>
    %39 = vector.multi_reduction <add>, %37, %cst_13 [0] : vector<8x1xf32> to vector<1xf32>
    %40 = vector.shape_cast %39 : vector<1xf32> to vector<1x1xf32>
    %41 = arith.addf %38, %40 : vector<1x1xf32>
    %c0_14 = arith.constant 0 : index
    %c0_15 = arith.constant 0 : index
    %42 = vector.load %arg5[%c0_14, %c0_15] : memref<1x1xf32, #tpu.memory_space<vmem>>, vector<1x1xf32>
    tpu.vector_store %arg5[%c0_14, %c0_15], %41 {strides = array<i32>} : memref<1x1xf32, #tpu.memory_space<vmem>>, vector<1x1xf32>,
    %c0_i32_16 = arith.constant 0 : i32
    %43 = arith.cmpi eq, %arg1, %c0_i32_16 : i32
    %44 = arith.extui %43 : i1 to i32
    %c0_i32_17 = arith.constant 0 : i32
    %45 = arith.cmpi ne, %44, %c0_i32_17 : i32
    scf.if %45 {
      %c0_18 = arith.constant 0 : index
      %c0_19 = arith.constant 0 : index
      %46 = vector.load %arg5[%c0_18, %c0_19] : memref<1x1xf32, #tpu.memory_space<vmem>>, vector<1x1xf32>
      %47 = vector.shape_cast %46 : vector<1x1xf32> to vector<1x1xf32>
      %48 = vector.broadcast %47 : vector<1x1xf32> to vector<8x128xf32>
      %c0_20 = arith.constant 0 : index
      %c0_21 = arith.constant 0 : index
      %49 = vector.load %arg4[%c0_20, %c0_21] : memref<8x128xf32, #tpu.memory_space<vmem>>, vector<8x128xf32>
      tpu.vector_store %arg4[%c0_20, %c0_21], %48 {strides = array<i32>} : memref<8x128xf32, #tpu.memory_space<vmem>>, vector<8x128xf32>,
    } else {
    }
    return
  }
  func.func @transform_0(%arg0: i32, %arg1: i32) -> (i32, i32) {
    %c1_i32 = arith.constant 1 : i32
    %0 = arith.muli %arg0, %c1_i32 : i32
    %1 = arith.addi %0, %arg1 : i32
    %c0_i32 = arith.constant 0 : i32
    %2 = arith.minsi %1, %c0_i32 : i32
    %c0_i32_0 = arith.constant 0 : i32
    %c0_i32_1 = arith.constant 0 : i32
    return %2, %c0_i32_0 : i32, i32
  }
  func.func @transform_1(%arg0: i32, %arg1: i32) -> (i32, i32) {
    %c1_i32 = arith.constant 1 : i32
    %0 = arith.muli %arg0, %c1_i32 : i32
    %1 = arith.addi %0, %arg1 : i32
    %c0_i32 = arith.constant 0 : i32
    %2 = arith.minsi %1, %c0_i32 : i32
    %c0_i32_0 = arith.constant 0 : i32
    %c0_i32_1 = arith.constant 0 : i32
    return %2, %c0_i32_0 : i32, i32
  }
  func.func @transform_2(%arg0: i32, %arg1: i32) -> (i32, i32) {
    %c0_i32 = arith.constant 0 : i32
    %c0_i32_0 = arith.constant 0 : i32
    return %arg0, %c0_i32 : i32, i32
  }
}

</mosaic_0001>

<llo_original>
// kernel: tpu_custom_call.1
$region0: #{tpu_custom_call.1}
  #allocation0 [shape = 'u32[]', space=smem, size = 0x4, offset = 0x4, fixed_abs, tag = 'smem constant byte address 0x4 - core index']
  #allocation1 [shape = 'u32[72,128]{1,0:T(1,128)}', space=vmem, size = 0x9000, scoped, tag = 'internal scratch']
  #allocation2 [shape = 'f32[1,1]{1,0:T(1,128)}', space=vmem, size = 0x200, scoped, tag = 'scratch operand']
  %s0 = inlined_call_operand.vmem [shape: f32[8,16], index: 0, kind: input, shape index: {}]
  %s1 = inlined_call_operand.vmem [shape: s32[8,1], index: 1, kind: input, shape index: {}]
  %s2 = inlined_call_operand.hbm [shape: f32[8,128], index: 2, kind: output, shape index: {}]
  %s3 = sld [smem:[#allocation0]]
  $region26: #{tpu_custom_call.1} parent=0
    _
  %s5 = ssub.s32 1, %s3
  %s6 = scalar_select 0, %s5, %s3
  $region1: #{tpu_custom_call.1} parent=0
    #allocation3 [shape = 'u8[4096]{0}', space=vmem, size = 0x1000, scoped, tag = 'output window, operand 0, single buffered']
    #allocation4 [shape = 's32[1]{0}', space=sflag, size = 0x4, scoped, tag = 'scoped memory for tpu_custom_call.1']
    %7 = vsyncpa [#allocation4], 0
    // Predicated region
    $region2: #{tpu_custom_call.1} parent=1 // pred_check
      _
    $region3: #{tpu_custom_call.1} parent=1 // pred_check_branch
      %9 = sbr.rel (0) target = $region5
    $region4: #{tpu_custom_call.1} parent=1 // pred_region
      %s10 = sadd.s32 0, 0
      %p11 = scmp.lt.s32.totalorder %s10, 0
      %s12 = scalar_select %p11, %s10, 0
      %p13 = scmp.lt.s32.totalorder %s12, 0
      %s14 = scalar_select %p13, %s12, 0
      %s15 = smul.addr %s14, 8
      %s16 = scalar_lea.vmem %s0, %s15
      %s17 = sadd.s32 0, 0
      %p18 = scmp.lt.s32.totalorder %s17, 0
      %s19 = scalar_select %p18, %s17, 0
    $region5: #{tpu_custom_call.1} parent=1 // pred_fallthru
      _
    // Predicated region
    $region6: #{tpu_custom_call.1} parent=1 // pred_check
      _
    $region7: #{tpu_custom_call.1} parent=1 // pred_check_branch
      %21 = sbr.rel (0) target = $region9
    $region8: #{tpu_custom_call.1} parent=1 // pred_region
      %s22 = sadd.s32 0, 0
      %p23 = scmp.lt.s32.totalorder %s22, 0
      %s24 = scalar_select %p23, %s22, 0
      %p25 = scmp.lt.s32.totalorder %s24, 0
      %s26 = scalar_select %p25, %s24, 0
      %s27 = smul.addr %s26, 8
      %s28 = scalar_lea.vmem %s1, %s27
      %s29 = sadd.s32 0, 0
      %p30 = scmp.lt.s32.totalorder %s29, 0
      %s31 = scalar_select %p30, %s29, 0
    $region9: #{tpu_custom_call.1} parent=1 // pred_fallthru
      _
    %s32 = sadd.s32 0, 0
    %p33 = scmp.lt.s32.totalorder %s32, 0
    %s34 = scalar_select %p33, %s32, 0
    %p35 = scmp.lt.s32.totalorder %s34, 0
    %s36 = scalar_select %p35, %s34, 0
    %s37 = smul.addr %s36, 8
    %s38 = scalar_lea.vmem %s0, %s37
    %s39 = sadd.s32 0, 0
    %p40 = scmp.lt.s32.totalorder %s39, 0
    %s41 = scalar_select %p40, %s39, 0
    %p42 = scmp.lt.s32.totalorder %s41, 0
    %s43 = scalar_select %p42, %s41, 0
    %s44 = smul.addr %s43, 8
    %s45 = scalar_lea.vmem %s1, %s44
    %s46 = sadd.s32 0, 0
    %p47 = scmp.lt.s32.totalorder %s46, 0
    %s48 = scalar_select %p47, %s46, 0
    %p49 = scmp.lt.s32.totalorder %s48, 0
    %s50 = scalar_select %p49, %s48, 0
    %s51 = smul.addr %s50, 8
    %s52 = scalar_lea.vmem %s0, %s51
    %s53 = sadd.s32 0, 0
    %p54 = scmp.lt.s32.totalorder %s53, 0
    %s55 = scalar_select %p54, %s53, 0
    %s56 = sadd.s32 0, 0
    %p57 = scmp.lt.s32.totalorder %s56, 0
    %s58 = scalar_select %p57, %s56, 0
    %p59 = scmp.lt.s32.totalorder %s58, 0
    %s60 = scalar_select %p59, %s58, 0
    %s61 = smul.addr %s60, 8
    %s62 = scalar_lea.vmem %s1, %s61
    %s63 = sadd.s32 0, 0
    %p64 = scmp.lt.s32.totalorder %s63, 0
    %s65 = scalar_select %p64, %s63, 0
    %p66 = scmp.eq.s32.totalorder 0, 0
    // Predicated region
    $region10: #{tpu_custom_call.1} parent=1 // pred_check
      %p67 = pneg %p66
    $region11: #{tpu_custom_call.1} parent=1 // pred_check_branch
      %69 = sbr.rel (%p67) target = $region13
    $region12: #{tpu_custom_call.1} parent=1 // pred_region
      %vm70 = vcmask 0
      %71 = vst.msk [vmem:[#allocation2] sm:$0x1] %vm70, 0.0
    $region13: #{tpu_custom_call.1} parent=1 // pred_fallthru
      _
    %v72 = vld [vmem:[%s52] sm:$0xff]
    %v73 = vld [vmem:[%s62] sm:$0xff]
    %vm74 = vcmask 130048
    %v75 = vsel %vm74, %v72, -inf
    %76 = vmax.xlane.f32.xlu0 %v75
    %v77 = vpop.xlane.xlu0 %76
    %v78 = vsub.f32 %v72, %v77
    %v79 = vmul.f32 %v78, 1.442695
    %v80 = vpow.pop %v79
    %v81 = vsel %vm74, %v80, 0.0
    %82 = vadd.xlane.f32.xlu0 %v81
    %v83 = vpop.xlane.xlu0 %82
    %v84 = vlog2.pop %v83
    %v85 = vmul.f32 %v84, 0.6931472
    %v86 = vsub.f32 %v78, %v85
    %v87 = vrcp.pop %v83
    %v88 = vmul.f32 %v83, %v87
    %v89 = vsub.f32 1.0, %v88
    %v90 = vmul.f32 %v87, %v89
    %v91 = vadd.f32 %v87, %v90
    %vm92 = vweird.f32 %v83
    %vm93 = vweird.f32 %v87
    %vm94 = vmor %vm92, %vm93
    %v95 = vsel %vm94, %v87, %v91
    %v96 = vand.u32 2147483647, %v83
    %vm97 = vcmp.eq.f32.partialorder %v96, 8.507059e+37
    %v98 = vand.u32 %v83, 2147483648
    %v99 = vor.u32 1.1754944e-38, %v98
    %v100 = vsel %vm97, %v99, %v95
    %v101 = vmul.f32 1.0, %v100
    %v102 = vmul.f32 %v80, %v101
    %v103 = vlaneseq
    %v104 = vand.u32 %v103, 127
    %105 = vset.pattern.permute.xlu0 0
    %106 = vperm.xlu0 %105, %v73
    %v107 = vpop.permute.xlu0 %106
    %vm108 = vcmp.eq.s32.totalorder %v104, %v107
    %v109 = vmul.f32 %v102, %v102
    %v110 = vmul.f32 %v109, %v109
    %v111 = vsel %vm108, 1.0, %v110
    %v112 = vmul.f32 %v86, %v111
    %v113 = vsel %vm108, 1, 0
    %v114 = vcvt.s32.f32 %v113
    %v115 = vmul.f32 %v114, 0.9
    %v116 = vadd.f32 %v115, 0.00625
    %v117 = vmul.f32 %v116, %v112
    %v118 = vsel %vm74, %v117, 0.0
    %119 = vadd.xlane.f32.xlu0 %v118
    %v120 = vpop.xlane.xlu0 %119
    %v121 = vsub.f32 0.0, %v120
    %v122 = vld [vmem:[#allocation2] sm:$0x1]
    %v123 = vrot.slane %v121, 4
    %v124 = vadd.f32 %v121, %v123
    %v125 = vrot.slane %v124, 2
    %v126 = vadd.f32 %v124, %v125
    %v127 = vrot.slane %v126, 1
    %v128 = vadd.f32 %v126, %v127
    %v129 = vadd.f32 %v122, %v128
    %vm130 = vcmask 0
    %131 = vst.msk [vmem:[#allocation2] sm:$0x1] %vm130, %v129
    // Predicated region
    $region14: #{tpu_custom_call.1} parent=1 // pred_check
      %p132 = pneg %p66
    $region15: #{tpu_custom_call.1} parent=1 // pred_check_branch
      %134 = sbr.rel (%p132) target = $region17
    $region16: #{tpu_custom_call.1} parent=1 // pred_region
      %v135 = vld [vmem:[#allocation2] sm:$0x1]
      %v137 = vperm.slane %v135, 0
      %138 = vset.pattern.permute.xlu0 0
      %139 = vperm.xlu0 %138, %v137
      %v140 = vpop.permute.xlu0 %139
      %142 = vst [vmem:[#allocation3] sm:$0xff] %v140
    $region17: #{tpu_custom_call.1} parent=1 // pred_fallthru
      _
    // Predicated region
    $region18: #{tpu_custom_call.1} parent=1 // pred_check
      _
    $region19: #{tpu_custom_call.1} parent=1 // pred_check_branch
      %144 = sbr.rel (0) target = $region21
    $region20: #{tpu_custom_call.1} parent=1 // pred_region
      %146 = vsyncadd [#allocation4], 0
      %s148 = sshll.u32 [#allocation3], 4
      %s149 = int_to_ptr.vmem [resolvable:$true] %s148
      %s150 = sshll.u32 %s2, 4
      %s151 = int_to_ptr.hbm [resolvable:$true] %s150
      %153 = dma.vmem_to_hbm [thread:$0]  %s149, 128, %s151, [#allocation4]
    $region21: #{tpu_custom_call.1} parent=1 // pred_fallthru
      _
    // Predicated region
    $region22: #{tpu_custom_call.1} parent=1 // pred_check
      _
    $region23: #{tpu_custom_call.1} parent=1 // pred_check_branch
      %155 = sbr.rel (0) target = $region25
    $region24: #{tpu_custom_call.1} parent=1 // pred_region
      %157 = dma.done [#allocation4], 128
    $region25: #{tpu_custom_call.1} parent=1 // pred_fallthru
      _
    %158 = vsyncpa [#allocation4], 1

</llo_original>
